<compile_context>
chip_gen: v7x
topology: tpu7x:2x2x1
jax: 0.10.0
libtpu: 0.0.40
codegen_flags: <defaults>
</compile_context>

<pallas_src>
import jax
import jax.numpy as jnp
import numpy as np
from jax import lax
from jax.experimental import pallas as pl
from jax.experimental.pallas import tpu as pltpu


def _gcn_kernel(x_ref, adj_ref, w_ref, b_ref, o_ref, support_ref):
    # x_ref:       (1, Cin_p, Np)     full node features (channels-first)
    # adj_ref:     (1, TN, Np)        TN adjacency rows for this node tile
    # w_ref:       (1, Cin_p, Cout_p)
    # b_ref:       (Cout_p, 1)
    # o_ref:       (1, Cout_p, TN)
    # support_ref: (Cout_p, Np)       VMEM scratch, persists across node tiles
    @pl.when(pl.program_id(1) == 0)
    def _compute_support():
        # support^T = W^T @ X -> (Cout_p, Np); both operands consumed in their
        # stored orientation (no wrapper-side transposes).
        support_ref[...] = lax.dot_general(
            w_ref[0], x_ref[0],
            dimension_numbers=(((0,), (0,)), ((), ())),
            preferred_element_type=jnp.float32)

    # out^T[c, n] = sum_m support^T[c, m] * adj[n, m]  -> (Cout_p, TN)
    out_t = lax.dot_general(
        support_ref[...], adj_ref[0],
        dimension_numbers=(((1,), (1,)), ((), ())),
        preferred_element_type=jnp.float32)
    out_t = out_t + b_ref[...]          # (Cout_p, 1) broadcast along lanes
    o_ref[0] = out_t.astype(o_ref.dtype)


def _choose_node_tile(n_padded, bytes_per_elt=4, budget_bytes=8 << 20):
    """Largest 128-multiple divisor of n_padded whose double-buffered adj row
    tile stays under `budget_bytes` (fits default scoped VMEM on all gens)."""
    best = 128
    t = 128
    while t <= n_padded:
        if n_padded % t == 0 and 2 * t * n_padded * bytes_per_elt <= budget_bytes:
            best = t
        t += 128
    return best


def _round_up(v, m):
    return v + (-v) % m


def graph_convolution(x, adj, weight, bias):
    """x: (B, C_in, N), adj: (B, N, N), weight: (B, C_in, C_out), bias: (C_out,).

    Returns (B, C_out, N), matching the PyTorch module's forward.
    """
    B, C_in, N = x.shape
    C_out = weight.shape[-1]

    # Pad node axis to a 128 multiple (lane-dense stores, (8,128) tiling) and
    # channel axes to 8 multiples (clean sublane layout).  Zero padding is
    # exact; padded output rows/cols are sliced off below.
    n_p = _round_up(N, 128)
    cin_p = _round_up(C_in, 8)
    cout_p = _round_up(C_out, 8)

    if (n_p, cin_p) != (N, C_in):
        x = jnp.pad(x, ((0, 0), (0, cin_p - C_in), (0, n_p - N)))
    if n_p != N:
        adj = jnp.pad(adj, ((0, 0), (0, n_p - N), (0, n_p - N)))
    if (cin_p, cout_p) != (C_in, C_out):
        weight = jnp.pad(weight, ((0, 0), (0, cin_p - C_in), (0, cout_p - C_out)))
    bias_col = jnp.pad(bias, (0, cout_p - C_out)).reshape(cout_p, 1)
    bias_col = bias_col.astype(jnp.float32)

    tn = _choose_node_tile(n_p)
    num_tiles = n_p // tn

    flops = 2 * B * N * C_in * C_out + 2 * B * N * N * C_out
    bytes_accessed = 4 * (x.size + adj.size + weight.size + bias_col.size
                          + B * cout_p * n_p)

    out = pl.pallas_call(
        _gcn_kernel,
        out_shape=jax.ShapeDtypeStruct((B, cout_p, n_p), x.dtype),
        grid_spec=pltpu.PrefetchScalarGridSpec(
            num_scalar_prefetch=0,
            grid=(B, num_tiles),
            in_specs=[
                pl.BlockSpec((1, cin_p, n_p), lambda b, n: (b, 0, 0)),
                pl.BlockSpec((1, tn, n_p), lambda b, n: (b, n, 0)),
                pl.BlockSpec((1, cin_p, cout_p), lambda b, n: (b, 0, 0)),
                pl.BlockSpec((cout_p, 1), lambda b, n: (0, 0)),
            ],
            out_specs=pl.BlockSpec((1, cout_p, tn), lambda b, n: (b, 0, n)),
            scratch_shapes=[pltpu.VMEM((cout_p, n_p), jnp.float32)],
        ),
        compiler_params=pltpu.CompilerParams(
            # Batch axis shards across v7x's 2 TensorCores; node-tile axis
            # carries the support scratch so it must stay sequential.
            dimension_semantics=("parallel", "arbitrary")),
        cost_estimate=pl.CostEstimate(
            flops=flops, transcendentals=0, bytes_accessed=bytes_accessed),
    )(x, adj, weight, bias_col)

    if cout_p != C_out or n_p != N:
        out = out[:, :C_out, :N]
    return out


def init_params(key, batch, in_features, out_features):
    """Deterministic stand-in for the module's per-forward xavier_normal_
    (gain=0.02) weight re-init + zero bias.  Weight shape mirrors the PyTorch
    forward: (B, in_features, out_features)."""
    # TODO(synk): the PyTorch module re-randomizes `weight` inside forward();
    # here the (already random) weight is passed in explicitly instead.
    std = 0.02 * np.sqrt(2.0 / (in_features + out_features))
    w = std * jax.random.normal(key, (batch, in_features, out_features),
                                dtype=jnp.float32)
    b = jnp.zeros((out_features,), dtype=jnp.float32)
    return w, b


if __name__ == "__main__":
    B, C_in, C_out, N = 2, 8, 16, 16

    key = jax.random.PRNGKey(0)
    kx, kadj, kw = jax.random.split(key, 3)

    x = jax.random.normal(kx, (B, C_in, N), dtype=jnp.float32)
    adj = jax.random.uniform(kadj, (B, N, N), dtype=jnp.float32)
    # row-normalize adj (typical GCN usage; keeps values well-conditioned)
    adj = adj / jnp.sum(adj, axis=-1, keepdims=True)

    weight, bias = init_params(kw, B, C_in, C_out)

    out = graph_convolution(x, adj, weight, bias)
    out = jax.block_until_ready(out)

    # Pure-JAX reference check
    xt = jnp.transpose(x, (0, 2, 1))                  # (B, N, C_in)
    support = jnp.einsum("bnc,bco->bno", xt, weight)  # (B, N, C_out)
    ref = jnp.einsum("bnm,bmo->bno", adj, support) + bias
    ref = jnp.transpose(ref, (0, 2, 1))               # (B, C_out, N)
    np.testing.assert_allclose(np.asarray(out), np.asarray(ref),
                               rtol=1e-5, atol=1e-5)

    print("KERNEL_OK")
</pallas_src>

<mosaic_0001>
module attributes {stable_mosaic.version = 11 : i64} {
  func.func @_gcn_kernel(%arg0: i32, %arg1: i32, %arg2: memref<1x8x128xf32, #tpu.memory_space<vmem>>, %arg3: memref<1x128x128xf32, #tpu.memory_space<vmem>>, %arg4: memref<1x8x16xf32, #tpu.memory_space<vmem>>, %arg5: memref<16x1xf32, #tpu.memory_space<vmem>>, %arg6: memref<1x16x128xf32, #tpu.memory_space<vmem>>, %arg7: memref<16x128xf32, #tpu.memory_space<vmem>>) attributes {dimension_semantics = [#tpu.dimension_semantics<parallel>, #tpu.dimension_semantics<arbitrary>], iteration_bounds = array<i64: 2, 1>, scalar_prefetch = 0 : i64, scratch_operands = 1 : i64, tpu.core_type = #tpu.core_type<tc>, window_params = [{transform_indices = @transform_0, window_bounds = array<i64: 1, 8, 128>}, {transform_indices = @transform_1, window_bounds = array<i64: 1, 128, 128>}, {transform_indices = @transform_2, window_bounds = array<i64: 1, 8, 16>}, {pipeline_mode = #tpu.pipeline_mode<synchronous>, transform_indices = @transform_3, window_bounds = array<i64: 16, 1>}, {transform_indices = @transform_4, window_bounds = array<i64: 1, 16, 128>}]} {
    %c0_i32 = arith.constant 0 : i32
    %0 = arith.cmpi eq, %arg1, %c0_i32 : i32
    %1 = arith.extui %0 : i1 to i32
    %c0_i32_0 = arith.constant 0 : i32
    %2 = arith.cmpi ne, %1, %c0_i32_0 : i32
    scf.if %2 {
      %c0_10 = arith.constant 0 : index
      %c0_11 = arith.constant 0 : index
      %c0_12 = arith.constant 0 : index
      %13 = vector.load %arg4[%c0_10, %c0_11, %c0_12] : memref<1x8x16xf32, #tpu.memory_space<vmem>>, vector<1x8x16xf32>
      %14 = vector.shape_cast %13 : vector<1x8x16xf32> to vector<8x16xf32>
      %c0_13 = arith.constant 0 : index
      %c0_14 = arith.constant 0 : index
      %c0_15 = arith.constant 0 : index
      %15 = vector.load %arg2[%c0_13, %c0_14, %c0_15] : memref<1x8x128xf32, #tpu.memory_space<vmem>>, vector<1x8x128xf32>
      %16 = vector.shape_cast %15 : vector<1x8x128xf32> to vector<8x128xf32>
      %cst_16 = arith.constant dense<0.000000e+00> : vector<16x128xf32>
      %17 = tpu.matmul %14, %16, %cst_16 {dimension_numbers = #tpu.dot_dimension_numbers<[0], [0], [1], [1], [0, 1, 1, 1], [], []>} : vector<8x16xf32>, vector<8x128xf32>, vector<16x128xf32> -> vector<16x128xf32>
      %c0_17 = arith.constant 0 : index
      %c0_18 = arith.constant 0 : index
      %18 = vector.load %arg7[%c0_17, %c0_18] : memref<16x128xf32, #tpu.memory_space<vmem>>, vector<16x128xf32>
      tpu.vector_store %arg7[%c0_17, %c0_18], %17 {strides = array<i32>} : memref<16x128xf32, #tpu.memory_space<vmem>>, vector<16x128xf32>,
    } else {
    }
    %c0 = arith.constant 0 : index
    %c0_1 = arith.constant 0 : index
    %3 = vector.load %arg7[%c0, %c0_1] : memref<16x128xf32, #tpu.memory_space<vmem>>, vector<16x128xf32>
    %c0_2 = arith.constant 0 : index
    %c0_3 = arith.constant 0 : index
    %c0_4 = arith.constant 0 : index
    %4 = vector.load %arg3[%c0_2, %c0_3, %c0_4] : memref<1x128x128xf32, #tpu.memory_space<vmem>>, vector<1x128x128xf32>
    %5 = vector.shape_cast %4 : vector<1x128x128xf32> to vector<128x128xf32>
    %cst = arith.constant dense<0.000000e+00> : vector<16x128xf32>
    %6 = tpu.matmul %3, %5, %cst {dimension_numbers = #tpu.dot_dimension_numbers<[1], [1], [0], [0], [0, 0, 1, 0], [], []>} : vector<16x128xf32>, vector<128x128xf32>, vector<16x128xf32> -> vector<16x128xf32>
    %c0_5 = arith.constant 0 : index
    %c0_6 = arith.constant 0 : index
    %7 = vector.load %arg5[%c0_5, %c0_6] : memref<16x1xf32, #tpu.memory_space<vmem>>, vector<16x1xf32>
    %8 = vector.broadcast %7 : vector<16x1xf32> to vector<16x128xf32>
    %9 = arith.addf %6, %8 : vector<16x128xf32>
    %c0_7 = arith.constant 0 : index
    %c0_8 = arith.constant 0 : index
    %c0_9 = arith.constant 0 : index
    %10 = vector.load %arg6[%c0_7, %c0_8, %c0_9] : memref<1x16x128xf32, #tpu.memory_space<vmem>>, vector<1x16x128xf32>
    %11 = vector.shape_cast %10 : vector<1x16x128xf32> to vector<16x128xf32>
    %12 = vector.shape_cast %9 : vector<16x128xf32> to vector<1x16x128xf32>
    tpu.vector_store %arg6[%c0_7, %c0_8, %c0_9], %12 {strides = array<i32>} : memref<1x16x128xf32, #tpu.memory_space<vmem>>, vector<1x16x128xf32>,
    return
  }
  func.func @transform_0(%arg0: i32, %arg1: i32) -> (i32, i32, i32) {
    %c0_i32 = arith.constant 0 : i32
    %c0_i32_0 = arith.constant 0 : i32
    %c0_i32_1 = arith.constant 0 : i32
    return %arg0, %c0_i32, %c0_i32_0 : i32, i32, i32
  }
  func.func @transform_1(%arg0: i32, %arg1: i32) -> (i32, i32, i32) {
    %c0_i32 = arith.constant 0 : i32
    %c0_i32_0 = arith.constant 0 : i32
    return %arg0, %arg1, %c0_i32 : i32, i32, i32
  }
  func.func @transform_2(%arg0: i32, %arg1: i32) -> (i32, i32, i32) {
    %c0_i32 = arith.constant 0 : i32
    %c0_i32_0 = arith.constant 0 : i32
    %c0_i32_1 = arith.constant 0 : i32
    return %arg0, %c0_i32, %c0_i32_0 : i32, i32, i32
  }
  func.func @transform_3(%arg0: i32, %arg1: i32) -> (i32, i32) {
    %c0_i32 = arith.constant 0 : i32
    %c0_i32_0 = arith.constant 0 : i32
    %c0_i32_1 = arith.constant 0 : i32
    return %c0_i32, %c0_i32_0 : i32, i32
  }
  func.func @transform_4(%arg0: i32, %arg1: i32) -> (i32, i32, i32) {
    %c0_i32 = arith.constant 0 : i32
    %c0_i32_0 = arith.constant 0 : i32
    return %arg0, %c0_i32, %arg1 : i32, i32, i32
  }
}

</mosaic_0001>

<llo_original>
// kernel: tpu_custom_call.1
$region0: #{tpu_custom_call.1}
  #allocation0 [shape = 'u32[]', space=smem, size = 0x4, offset = 0x4, fixed_abs, tag = 'smem constant byte address 0x4 - core index']
  #allocation1 [shape = 'u32[144,128]{1,0:T(1,128)}', space=vmem, size = 0x12000, scoped, tag = 'internal scratch']
  #allocation2 [shape = 'f32[16,128]{1,0:T(8,128)}', space=vmem, size = 0x2000, scoped, tag = 'scratch operand']
  %s0 = inlined_call_operand.vmem [shape: f32[2,8,128], index: 0, kind: input, shape index: {}]
  %s1 = inlined_call_operand.hbm [shape: f32[2,128,128], index: 1, kind: input, shape index: {}]
  %s2 = inlined_call_operand.hbm [shape: f32[2,8,16], index: 2, kind: input, shape index: {}]
  %s3 = inlined_call_operand.vmem [shape: f32[16,1], index: 3, kind: input, shape index: {}]
  %s4 = inlined_call_operand.hbm [shape: f32[2,16,128], index: 4, kind: output, shape index: {}]
  %s5 = sld [smem:[#allocation0]]
  $region61: #{tpu_custom_call.1} parent=0
    _
  %s7 = ssub.s32 1, %s5
  %s8 = scalar_select 0, %s7, %s5
  $region1: #{tpu_custom_call.1} parent=0
    #allocation3 [shape = 'u8[131072]{0}', space=vmem, size = 0x20000, scoped, tag = 'input window, operand 1']
    #allocation4 [shape = 's32[2]{0}', space=sflag, size = 0x8, scoped, tag = 'scoped memory for tpu_custom_call.1']
    #allocation5 [shape = 's32[2]{0}', space=sflag, size = 0x8, scoped, tag = 'scoped memory for tpu_custom_call.1']
    #allocation6 [shape = 'u8[8192]{0}', space=vmem, size = 0x2000, scoped, tag = 'input window, operand 2']
    #allocation7 [shape = 's32[2]{0}', space=sflag, size = 0x8, scoped, tag = 'scoped memory for tpu_custom_call.1']
    #allocation8 [shape = 'u8[16384]{0}', space=vmem, size = 0x4000, scoped, tag = 'output window, operand 0']
    %9 = vsyncpa [#allocation4], 0
    %s10 = scalar_lea.sflag [#allocation4], 1
    %11 = vsyncpa %s10, 0
    %12 = vsyncpa [#allocation7], 0
    %s13 = scalar_lea.sflag [#allocation7], 1
    %14 = vsyncpa %s13, 0
    %15 = vsyncpa [#allocation5], 0
    %s16 = scalar_lea.sflag [#allocation5], 1
    %17 = vsyncpa %s16, 0
    loop: start=0, step=1, limit=4
    $region2: #{tpu_custom_call.1} parent=1 // loop_pre_header
      _
    $region3: #{tpu_custom_call.1} parent=1 // loop_header
      %s19 = sphi 0, %s23
      %p20 = scmp.ge.s32.totalorder %s19, 4
      %s26 = sphi 0, %s38
      %s27 = sphi 0, %s34
      %s28 = sphi 0, %s26
      %s29 = sphi 0, %s27
      %s30 = sphi 0, %s28
      %s31 = sphi 0, %s29
      %s41 = sphi 0, %s43
      %s44 = sphi 0, %s41
      %s45 = sphi 0, %s44
      %s61 = sphi 0, %s45
      %s69 = sphi 0, %s71
      %s72 = sphi 0, %s69
      %s73 = sphi 0, %s72
      %s89 = sphi 0, %s73
      %s95 = sphi 0, %s97
      %s98 = sphi 0, %s95
      %s99 = sphi 0, %s98
      %s115 = sphi 0, %s99
      %s119 = sphi 0, %s119
      %s121 = sphi 0, %s119
      %s122 = sphi 0, %s121
      %s136 = sphi 0, %s122
      %s144 = sphi 0, %s146
      %s147 = sphi 0, %s144
      %s148 = sphi 0, %s147
      %s164 = sphi 0, %s148
    $region4: #{tpu_custom_call.1} parent=1 // loop_header_branch
      %22 = sbr.rel (%p20) target = $region8
    $region5: #{tpu_custom_call.1} parent=1 // loop_body
      %s24 = ssub.s32 %s19, 1
      %s25 = ssub.s32 %s19, 2
      %s32 = sadd.s32 1, %s27
      %p33 = scmp.ge.s32.totalorder %s32, 1
      %s34 = scalar_select %p33, 0, %s32
      %s35 = sadd.s32 1, %s26
      %s36 = scalar_select %p33, %s35, %s26
      %p37 = scmp.ge.s32.totalorder %s36, 2
      %s38 = scalar_select %p37, 0, %s36
      %s39 = ssub.s32 %s26, %s38
      %p40 = scmp.eq.s32.totalorder %s39, 0
      %s42 = sadd.s32 %s41, 1
      %s43 = scalar_select %p40, %s41, %s42
      %p46 = pneg %p40
      %p47 = scmp.eq.s32.totalorder %s19, 1
      %p48 = por %p46, %p47
      %p49 = scmp.ne.s32.totalorder %s41, %s44
      %p50 = scmp.eq.s32.totalorder %s19, 0
      %p51 = por %p49, %p50
      %p52 = scmp.ne.s32.totalorder %s41, %s44
      %p53 = scmp.eq.s32.totalorder %s24, 1
      %p54 = por %p52, %p53
      %p55 = scmp.ne.s32.totalorder %s44, %s45
      %p56 = scmp.eq.s32.totalorder %s24, 0
      %p57 = por %p55, %p56
      %p58 = scmp.ne.s32.totalorder %s44, %s45
      %p59 = scmp.eq.s32.totalorder %s25, 1
      %p60 = por %p58, %p59
      %p62 = scmp.ne.s32.totalorder %s45, %s61
      %p63 = scmp.eq.s32.totalorder %s25, 0
      %p64 = por %p62, %p63
      %s65 = ssub.s32 %s26, %s38
      %s66 = ssub.s32 %s27, %s34
      %s67 = sor.u32 %s65, %s66
      %p68 = scmp.eq.s32.totalorder %s67, 0
      %s70 = sadd.s32 %s69, 1
      %s71 = scalar_select %p68, %s69, %s70
      %p74 = pneg %p68
      %p75 = scmp.eq.s32.totalorder %s19, 1
      %p76 = por %p74, %p75
      %p77 = scmp.ne.s32.totalorder %s69, %s72
      %p78 = scmp.eq.s32.totalorder %s19, 0
      %p79 = por %p77, %p78
      %p80 = scmp.ne.s32.totalorder %s69, %s72
      %p81 = scmp.eq.s32.totalorder %s24, 1
      %p82 = por %p80, %p81
      %p83 = scmp.ne.s32.totalorder %s72, %s73
      %p84 = scmp.eq.s32.totalorder %s24, 0
      %p85 = por %p83, %p84
      %p86 = scmp.ne.s32.totalorder %s72, %s73
      %p87 = scmp.eq.s32.totalorder %s25, 1
      %p88 = por %p86, %p87
      %p90 = scmp.ne.s32.totalorder %s73, %s89
      %p91 = scmp.eq.s32.totalorder %s25, 0
      %p92 = por %p90, %p91
      %s93 = ssub.s32 %s26, %s38
      %p94 = scmp.eq.s32.totalorder %s93, 0
      %s96 = sadd.s32 %s95, 1
      %s97 = scalar_select %p94, %s95, %s96
      %p100 = pneg %p94
      %p101 = scmp.eq.s32.totalorder %s19, 1
      %p102 = por %p100, %p101
      %p103 = scmp.ne.s32.totalorder %s95, %s98
      %p104 = scmp.eq.s32.totalorder %s19, 0
      %p105 = por %p103, %p104
      %p106 = scmp.ne.s32.totalorder %s95, %s98
      %p107 = scmp.eq.s32.totalorder %s24, 1
      %p108 = por %p106, %p107
      %p109 = scmp.ne.s32.totalorder %s98, %s99
      %p110 = scmp.eq.s32.totalorder %s24, 0
      %p111 = por %p109, %p110
      %p112 = scmp.ne.s32.totalorder %s98, %s99
      %p113 = scmp.eq.s32.totalorder %s25, 1
      %p114 = por %p112, %p113
      %p116 = scmp.ne.s32.totalorder %s99, %s115
      %p117 = scmp.eq.s32.totalorder %s25, 0
      %p118 = por %p116, %p117
      %s120 = sadd.s32 %s119, 1
      %p123 = scmp.eq.s32.totalorder %s19, 1
      %p124 = scmp.ne.s32.totalorder %s119, %s121
      %p125 = scmp.eq.s32.totalorder %s19, 0
      %p126 = por %p124, %p125
      %p127 = scmp.ne.s32.totalorder %s119, %s121
      %p128 = scmp.eq.s32.totalorder %s24, 1
      %p129 = por %p127, %p128
      %p130 = scmp.ne.s32.totalorder %s121, %s122
      %p131 = scmp.eq.s32.totalorder %s24, 0
      %p132 = por %p130, %p131
      %p133 = scmp.ne.s32.totalorder %s121, %s122
      %p134 = scmp.eq.s32.totalorder %s25, 1
      %p135 = por %p133, %p134
      %p137 = scmp.ne.s32.totalorder %s122, %s136
      %p138 = scmp.eq.s32.totalorder %s25, 0
      %p139 = por %p137, %p138
      %s140 = ssub.s32 %s26, %s38
      %s141 = ssub.s32 %s27, %s34
      %s142 = sor.u32 %s140, %s141
      %p143 = scmp.eq.s32.totalorder %s142, 0
      %s145 = sadd.s32 %s144, 1
      %s146 = scalar_select %p143, %s144, %s145
      %p149 = pneg %p143
      %p150 = scmp.eq.s32.totalorder %s19, 1
      %p151 = por %p149, %p150
      %p152 = scmp.ne.s32.totalorder %s144, %s147
      %p153 = scmp.eq.s32.totalorder %s19, 0
      %p154 = por %p152, %p153
      %p155 = scmp.ne.s32.totalorder %s144, %s147
      %p156 = scmp.eq.s32.totalorder %s24, 1
      %p157 = por %p155, %p156
      %p158 = scmp.ne.s32.totalorder %s147, %s148
      %p159 = scmp.eq.s32.totalorder %s24, 0
      %p160 = por %p158, %p159
      %p161 = scmp.ne.s32.totalorder %s147, %s148
      %p162 = scmp.eq.s32.totalorder %s25, 1
      %p163 = por %p161, %p162
      %p165 = scmp.ne.s32.totalorder %s148, %s164
      %p166 = scmp.eq.s32.totalorder %s25, 0
      %p167 = por %p165, %p166
      %p168 = scmp.le.s32.totalorder 1, %s19
      %p169 = scmp.lt.s32.totalorder %s19, 3
      %p170 = pnand %p168, %p169
      %p171 = pneg %p170
      // Predicated region
      $region9: #{tpu_custom_call.1} parent=5 // pred_check
        _
      $region10: #{tpu_custom_call.1} parent=5 // pred_check_branch
        %173 = sbr.rel (%p170) target = $region12
      $region11: #{tpu_custom_call.1} parent=5 // pred_region
        %s174 = ssub.s32 %s19, 1
        // Predicated region
        $region13: #{tpu_custom_call.1} parent=11 // pred_check
          %p175 = pneg %p132
        $region14: #{tpu_custom_call.1} parent=11 // pred_check_branch
          %177 = sbr.rel (%p175) target = $region16
        $region15: #{tpu_custom_call.1} parent=11 // pred_region
          _
        $region16: #{tpu_custom_call.1} parent=11 // pred_fallthru
          _
      $region12: #{tpu_custom_call.1} parent=5 // pred_fallthru
        _
      %p178 = scmp.lt.s32.totalorder %s19, 2
      // Predicated region
      $region17: #{tpu_custom_call.1} parent=5 // pred_check
        %p179 = pneg %p178
      $region18: #{tpu_custom_call.1} parent=5 // pred_check_branch
        %181 = sbr.rel (%p179) target = $region20
      $region19: #{tpu_custom_call.1} parent=5 // pred_region
        // Predicated region
        $region21: #{tpu_custom_call.1} parent=19 // pred_check
          %p182 = pneg %p51
        $region22: #{tpu_custom_call.1} parent=19 // pred_check_branch
          %184 = sbr.rel (%p182) target = $region24
        $region23: #{tpu_custom_call.1} parent=19 // pred_region
          %p185 = scmp.lt.s32.totalorder %s26, 1
          %s186 = scalar_select %p185, %s26, 1
          %s187 = smul.addr %s186, 8
          %s188 = scalar_lea.vmem %s0, %s187
        $region24: #{tpu_custom_call.1} parent=19 // pred_fallthru
          _
        // Predicated region
        $region25: #{tpu_custom_call.1} parent=19 // pred_check
          %p189 = pneg %p79
        $region26: #{tpu_custom_call.1} parent=19 // pred_check_branch
          %191 = sbr.rel (%p189) target = $region28
        $region27: #{tpu_custom_call.1} parent=19 // pred_region
          %s192 = sand.u32 %s69, 1
          %s193 = scalar_lea.sflag [#allocation4], %s192
          %s194 = sand.u32 %s69, 1
          %s195 = smul.addr %s194, 128
          %s196 = scalar_lea.vmem [#allocation3], %s195
          %s197 = smul.u32 16, %s27
          %s199 = ssub.s32 2048, 2048
          %200 = vsyncadd %s193, %s199
          %s201 = smul.addr %s26, 16
          %s202 = sadd.s32 %s197, %s201
          %s203 = smul.addr %s202, 128
          %s204 = scalar_lea.hbm %s1, %s203
          %s205 = sshll.u32 %s196, 4
          %s206 = int_to_ptr.vmem [resolvable:$true] %s205
          %211 = dma.hbm_to_vmem [thread:$0]  %s204, 2048, %s206, %s193, 128, 128, 8
        $region28: #{tpu_custom_call.1} parent=19 // pred_fallthru
          _
        // Predicated region
        $region29: #{tpu_custom_call.1} parent=19 // pred_check
          %p212 = pneg %p105
        $region30: #{tpu_custom_call.1} parent=19 // pred_check_branch
          %214 = sbr.rel (%p212) target = $region32
        $region31: #{tpu_custom_call.1} parent=19 // pred_region
          %s215 = sand.u32 %s95, 1
          %s216 = scalar_lea.sflag [#allocation7], %s215
          %s217 = sand.u32 %s95, 1
          %s218 = smul.addr %s217, 8
          %s219 = scalar_lea.vmem [#allocation6], %s218
          %s221 = ssub.s32 128, 128
          %222 = vsyncadd %s216, %s221
          %s223 = smul.addr %s26, 128
          %s224 = scalar_lea.hbm %s2, %s223
          %s226 = sshll.u32 %s219, 4
          %s227 = int_to_ptr.vmem [resolvable:$true] %s226
          %229 = dma.hbm_to_vmem [thread:$0]  %s224, 128, %s227, %s216
        $region32: #{tpu_custom_call.1} parent=19 // pred_fallthru
          _
      $region20: #{tpu_custom_call.1} parent=5 // pred_fallthru
        _
      %p230 = scmp.le.s32.totalorder 1, %s19
      %p231 = scmp.lt.s32.totalorder %s19, 3
      %p232 = pnand %p230, %p231
      %p233 = pneg %p232
      // Predicated region
      $region33: #{tpu_custom_call.1} parent=5 // pred_check
        _
      $region34: #{tpu_custom_call.1} parent=5 // pred_check_branch
        %235 = sbr.rel (%p232) target = $region36
      $region35: #{tpu_custom_call.1} parent=5 // pred_region
        %s236 = ssub.s32 %s19, 1
        %s237 = sand.u32 %s72, 1
        %s238 = scalar_lea.sflag [#allocation4], %s237
        %s239 = sand.u32 %s72, 1
        %s240 = smul.addr %s239, 128
        %s241 = scalar_lea.vmem [#allocation3], %s240
        // Predicated region
        $region37: #{tpu_custom_call.1} parent=35 // pred_check
          %p242 = pneg %p85
        $region38: #{tpu_custom_call.1} parent=35 // pred_check_branch
          %244 = sbr.rel (%p242) target = $region40
        $region39: #{tpu_custom_call.1} parent=35 // pred_region
          %245 = dma.done %s238, 2048
        $region40: #{tpu_custom_call.1} parent=35 // pred_fallthru
          _
        %s246 = sand.u32 %s98, 1
        %s247 = scalar_lea.sflag [#allocation7], %s246
        %s248 = sand.u32 %s98, 1
        %s249 = smul.addr %s248, 8
        %s250 = scalar_lea.vmem [#allocation6], %s249
        // Predicated region
        $region41: #{tpu_custom_call.1} parent=35 // pred_check
          %p251 = pneg %p111
        $region42: #{tpu_custom_call.1} parent=35 // pred_check_branch
          %253 = sbr.rel (%p251) target = $region44
        $region43: #{tpu_custom_call.1} parent=35 // pred_region
          %254 = dma.done %s247, 128
        $region44: #{tpu_custom_call.1} parent=35 // pred_fallthru
          _
        %p255 = scmp.lt.s32.totalorder %s28, 1
        %s256 = scalar_select %p255, %s28, 1
        %s257 = smul.addr %s256, 8
        %s258 = scalar_lea.vmem %s0, %s257
        %p259 = pneg %p57
        %p260 = pneg %p54
        %s261 = sand.u32 %s72, 1
        %s262 = scalar_lea.sflag [#allocation4], %s261
        %s263 = sand.u32 %s72, 1
        %s264 = smul.addr %s263, 128
        %s265 = scalar_lea.vmem [#allocation3], %s264
        %p266 = pneg %p85
        %p267 = pneg %p82
        %s268 = sand.u32 %s98, 1
        %s269 = scalar_lea.sflag [#allocation7], %s268
        %s270 = sand.u32 %s98, 1
        %s271 = smul.addr %s270, 8
        %s272 = scalar_lea.vmem [#allocation6], %s271
        %p273 = pneg %p111
        %p274 = pneg %p108
        %p275 = pneg %p132
        %p276 = pneg %p129
        %p277 = pneg %p160
        %p278 = pneg %p157
        %s279 = sand.u32 %s147, 1
        %s280 = scalar_lea.sflag [#allocation5], %s279
        %s281 = sand.u32 %s147, 1
        %s282 = smul.addr %s281, 16
        %s283 = scalar_lea.vmem [#allocation8], %s282
        %p284 = scmp.lt.s32.totalorder %s28, 1
        %s285 = scalar_select %p284, %s28, 1
        %s286 = smul.addr %s285, 8
        %s287 = scalar_lea.vmem %s0, %s286
        %s288 = smul.u32 16, %s29
        %p289 = scmp.eq.s32.totalorder %s29, 0
        // Predicated region
        $region45: #{tpu_custom_call.1} parent=35 // pred_check
          %p290 = pneg %p289
        $region46: #{tpu_custom_call.1} parent=35 // pred_check_branch
          %292 = sbr.rel (%p290) target = $region48
        $region47: #{tpu_custom_call.1} parent=35 // pred_region
          %v293 = vld [vmem:[%s250] sm:$0xff]
          %v294 = vld [vmem:[%s287] sm:$0xff]
          %295 = vxpose.xlu0.b32.start [1/16] %v293, 128
          %296 = vxpose.xlu0.b32.cont [2/16] 0.0, 128
          %297 = vxpose.xlu0.b32.cont [3/16] 0.0, 128
          %298 = vxpose.xlu0.b32.cont [4/16] 0.0, 128
          %299 = vxpose.xlu0.b32.cont [5/16] 0.0, 128
          %300 = vxpose.xlu0.b32.cont [6/16] 0.0, 128
          %301 = vxpose.xlu0.b32.cont [7/16] 0.0, 128
          %302 = vxpose.xlu0.b32.cont [8/16] 0.0, 128
          %303 = vxpose.xlu0.b32.cont [9/16] 0.0, 128
          %304 = vxpose.xlu0.b32.cont [10/16] 0.0, 128
          %305 = vxpose.xlu0.b32.cont [11/16] 0.0, 128
          %306 = vxpose.xlu0.b32.cont [12/16] 0.0, 128
          %307 = vxpose.xlu0.b32.cont [13/16] 0.0, 128
          %308 = vxpose.xlu0.b32.cont [14/16] 0.0, 128
          %309 = vxpose.xlu0.b32.cont [15/16] 0.0, 128
          %310 = vxpose.xlu0.b32.end [16/16] 0.0, 128
          %v311 = vpop.trf.xlu0
          %v312 = vpop.trf.xlu0
          %v313 = vpop.trf.xlu0
          %v314 = vpop.trf.xlu0
          %v315 = vpop.trf.xlu0
          %v316 = vpop.trf.xlu0
          %v317 = vpop.trf.xlu0
          %v318 = vpop.trf.xlu0
          %v319 = vpop.trf.xlu0
          %v320 = vpop.trf.xlu0
          %v321 = vpop.trf.xlu0
          %v322 = vpop.trf.xlu0
          %v323 = vpop.trf.xlu0
          %v324 = vpop.trf.xlu0
          %v325 = vpop.trf.xlu0
          %v326 = vpop.trf.xlu0
          %vm327 = vcmask 64512
          %v329 = vsel %vm327, %v311, 0
          %v332 = vsel %vm327, %v312, 0
          %334 = vmatprep.subr.mxu0 0.0
          %335 = vmatpush1.msra.mxu0 %v294
          %336 = vmatprep.subr.mxu0 0.0
          %337 = vmatpush1.msra.mxu0 0.0
          %338 = vmatprep.subr.mxu0 0.0
          %339 = vmatpush1.msra.mxu0 0.0
          %340 = vmatprep.subr.mxu0 0.0
          %341 = vmatpush1.msra.mxu0 0.0
          %342 = vmatprep.subr.mxu0 0.0
          %343 = vmatpush1.msra.mxu0 0.0
          %344 = vmatprep.subr.mxu0 0.0
          %345 = vmatpush1.msra.mxu0 0.0
          %346 = vmatprep.subr.mxu0 0.0
          %347 = vmatpush1.msra.mxu0 0.0
          %348 = vmatprep.subr.mxu0 0.0
          %349 = vmatpush1.msra.mxu0 0.0
          %350 = vmatprep.subr.mxu0 0.0
          %351 = vmatpush1.msra.mxu0 0.0
          %352 = vmatprep.subr.mxu0 0.0
          %353 = vmatpush1.msra.mxu0 0.0
          %354 = vmatprep.subr.mxu0 0.0
          %355 = vmatpush1.msra.mxu0 0.0
          %356 = vmatprep.subr.mxu0 0.0
          %357 = vmatpush1.msra.mxu0 0.0
          %358 = vmatprep.subr.mxu0 0.0
          %359 = vmatpush1.msra.mxu0 0.0
          %360 = vmatprep.subr.mxu0 0.0
          %361 = vmatpush1.msra.mxu0 0.0
          %362 = vmatprep.subr.mxu0 0.0
          %363 = vmatpush1.msra.mxu0 0.0
          %364 = vmatprep.subr.mxu0 0.0
          %365 = vmatpush1.msra.mxu0 0.0
          %366 = vmatprep.subr.mxu0 0.0
          %367 = vmatpush1.msra.mxu0 0.0
          %368 = vmatprep.subr.mxu0 0.0
          %369 = vmatpush1.msra.mxu0 0.0
          %370 = vmatprep.subr.mxu0 0.0
          %371 = vmatpush1.msra.mxu0 0.0
          %372 = vmatprep.subr.mxu0 0.0
          %373 = vmatpush1.msra.mxu0 0.0
          %374 = vmatprep.subr.mxu0 0.0
          %375 = vmatpush1.msra.mxu0 0.0
          %376 = vmatprep.subr.mxu0 0.0
          %377 = vmatpush1.msra.mxu0 0.0
          %378 = vmatprep.subr.mxu0 0.0
          %379 = vmatpush1.msra.mxu0 0.0
          %380 = vmatprep.subr.mxu0 0.0
          %381 = vmatpush1.msra.mxu0 0.0
          %382 = vmatprep.subr.mxu0 0.0
          %383 = vmatpush1.msra.mxu0 0.0
          %384 = vmatprep.subr.mxu0 0.0
          %385 = vmatpush1.msra.mxu0 0.0
          %386 = vmatprep.subr.mxu0 0.0
          %387 = vmatpush1.msra.mxu0 0.0
          %388 = vmatprep.subr.mxu0 0.0
          %389 = vmatpush1.msra.mxu0 0.0
          %390 = vmatprep.subr.mxu0 0.0
          %391 = vmatpush1.msra.mxu0 0.0
          %392 = vmatprep.subr.mxu0 0.0
          %393 = vmatpush1.msra.mxu0 0.0
          %394 = vmatprep.subr.mxu0 0.0
          %395 = vmatpush1.msra.mxu0 0.0
          %396 = vmatprep.subr.mxu0 0.0
          %397 = vmatpush1.msra.mxu0 0.0
          %398 = vmatprep.mubr.f32.mxu0 0.0
          %399 = vmatmul.mubr.f32.gmra.mrb[0].mxu0 %v329
          %v400 = vpop.f32.mrb[0].mxu0
          %v401 = vadd.f32 0.0, %v400
          %v402 = vpop.f32.mrb[0].mxu0
          %403 = vmatprep.mubr.f32.mxu0 0.0
          %404 = vmatmul.mubr.f32.gmra.mrb[0].mxu0 %v332
          %v405 = vpop.f32.mrb[0].mxu0
          %v406 = vadd.f32 0.0, %v405
          %v407 = vpop.f32.mrb[0].mxu0
          %408 = vdwg.mxu0
          %409 = vst [vmem:[#allocation2] sm:$0xff] %v401
          %410 = vst [vmem:[#allocation2 + $0x8] sm:$0xff] %v406
        $region48: #{tpu_custom_call.1} parent=35 // pred_fallthru
          _
        %v411 = vld [vmem:[#allocation2] sm:$0xff]
        %v412 = vld [vmem:[#allocation2 + $0x8] sm:$0xff]
        %v413 = vld [vmem:[%s241] sm:$0xff]
        %v414 = vld [vmem:[%s241 + $0x8] sm:$0xff]
        %v415 = vld [vmem:[%s241 + $0x10] sm:$0xff]
        %v416 = vld [vmem:[%s241 + $0x18] sm:$0xff]
        %v417 = vld [vmem:[%s241 + $0x20] sm:$0xff]
        %v418 = vld [vmem:[%s241 + $0x28] sm:$0xff]
        %v419 = vld [vmem:[%s241 + $0x30] sm:$0xff]
        %v420 = vld [vmem:[%s241 + $0x38] sm:$0xff]
        %v421 = vld [vmem:[%s241 + $0x40] sm:$0xff]
        %v422 = vld [vmem:[%s241 + $0x48] sm:$0xff]
        %v423 = vld [vmem:[%s241 + $0x50] sm:$0xff]
        %v424 = vld [vmem:[%s241 + $0x58] sm:$0xff]
        %v425 = vld [vmem:[%s241 + $0x60] sm:$0xff]
        %v426 = vld [vmem:[%s241 + $0x68] sm:$0xff]
        %v427 = vld [vmem:[%s241 + $0x70] sm:$0xff]
        %v428 = vld [vmem:[%s241 + $0x78] sm:$0xff]
        %v429 = vld [vmem:[%s3] sm:$0xff]
        %v430 = vld [vmem:[%s3 + $0x8] sm:$0xff]
        %432 = vset.pattern.permute.xlu0 0
        %433 = vperm.xlu0 %432, %v429
        %v434 = vpop.permute.xlu0 %433
        %437 = vset.pattern.permute.xlu0 0
        %438 = vperm.xlu0 %437, %v430
        %v439 = vpop.permute.xlu0 %438
        %441 = vmatprep.subr.mxu0 0.0
        %442 = vmatpush1.xpose.msra.mxu0 %v413
        %443 = vmatprep.subr.mxu0 0.0
        %444 = vmatpush1.xpose.msra.mxu0 %v414
        %445 = vmatprep.subr.mxu0 0.0
        %446 = vmatpush1.xpose.msra.mxu0 %v415
        %447 = vmatprep.subr.mxu0 0.0
        %448 = vmatpush1.xpose.msra.mxu0 %v416
        %449 = vmatprep.subr.mxu0 0.0
        %450 = vmatpush1.xpose.msra.mxu0 %v417
        %451 = vmatprep.subr.mxu0 0.0
        %452 = vmatpush1.xpose.msra.mxu0 %v418
        %453 = vmatprep.subr.mxu0 0.0
        %454 = vmatpush1.xpose.msra.mxu0 %v419
        %455 = vmatprep.subr.mxu0 0.0
        %456 = vmatpush1.xpose.msra.mxu0 %v420
        %457 = vmatprep.subr.mxu0 0.0
        %458 = vmatpush1.xpose.msra.mxu0 %v421
        %459 = vmatprep.subr.mxu0 0.0
        %460 = vmatpush1.xpose.msra.mxu0 %v422
        %461 = vmatprep.subr.mxu0 0.0
        %462 = vmatpush1.xpose.msra.mxu0 %v423
        %463 = vmatprep.subr.mxu0 0.0
        %464 = vmatpush1.xpose.msra.mxu0 %v424
        %465 = vmatprep.subr.mxu0 0.0
        %466 = vmatpush1.xpose.msra.mxu0 %v425
        %467 = vmatprep.subr.mxu0 0.0
        %468 = vmatpush1.xpose.msra.mxu0 %v426
        %469 = vmatprep.subr.mxu0 0.0
        %470 = vmatpush1.xpose.msra.mxu0 %v427
        %471 = vmatprep.subr.mxu0 0.0
        %472 = vmatpush1.xpose.msra.mxu0 %v428
        %473 = vmatprep.subr.mxu0 0.0
        %474 = vmatpush1.xpose.msra.mxu0 0.0
        %475 = vmatprep.subr.mxu0 0.0
        %476 = vmatpush1.xpose.msra.mxu0 0.0
        %477 = vmatprep.subr.mxu0 0.0
        %478 = vmatpush1.xpose.msra.mxu0 0.0
        %479 = vmatprep.subr.mxu0 0.0
        %480 = vmatpush1.xpose.msra.mxu0 0.0
        %481 = vmatprep.subr.mxu0 0.0
        %482 = vmatpush1.xpose.msra.mxu0 0.0
        %483 = vmatprep.subr.mxu0 0.0
        %484 = vmatpush1.xpose.msra.mxu0 0.0
        %485 = vmatprep.subr.mxu0 0.0
        %486 = vmatpush1.xpose.msra.mxu0 0.0
        %487 = vmatprep.subr.mxu0 0.0
        %488 = vmatpush1.xpose.msra.mxu0 0.0
        %489 = vmatprep.subr.mxu0 0.0
        %490 = vmatpush1.xpose.msra.mxu0 0.0
        %491 = vmatprep.subr.mxu0 0.0
        %492 = vmatpush1.xpose.msra.mxu0 0.0
        %493 = vmatprep.subr.mxu0 0.0
        %494 = vmatpush1.xpose.msra.mxu0 0.0
        %495 = vmatprep.subr.mxu0 0.0
        %496 = vmatpush1.xpose.msra.mxu0 0.0
        %497 = vmatprep.subr.mxu0 0.0
        %498 = vmatpush1.xpose.msra.mxu0 0.0
        %499 = vmatprep.subr.mxu0 0.0
        %500 = vmatpush1.xpose.msra.mxu0 0.0
        %501 = vmatprep.subr.mxu0 0.0
        %502 = vmatpush1.xpose.msra.mxu0 0.0
        %503 = vmatprep.subr.mxu0 0.0
        %504 = vmatpush1.xpose.msra.mxu0 0.0
        %505 = vmatprep.mubr.f32.mxu0 0.0
        %506 = vmatmul.mubr.f32.gmra.mrb[0].mxu0 %v411
        %v507 = vpop.f32.mrb[0].mxu0
        %v508 = vadd.f32 %v434, %v507
        %v509 = vpop.f32.mrb[0].mxu0
        %510 = vmatprep.mubr.f32.mxu0 0.0
        %511 = vmatmul.mubr.f32.gmra.mrb[0].mxu0 %v412
        %v512 = vpop.f32.mrb[0].mxu0
        %v513 = vadd.f32 %v439, %v512
        %v514 = vpop.f32.mrb[0].mxu0
        %515 = vdwg.mxu0
        %516 = vst [vmem:[%s283] sm:$0xff] %v508
        %517 = vst [vmem:[%s283 + $0x8] sm:$0xff] %v513
        %s518 = sand.u32 %s147, 1
        %s519 = scalar_lea.sflag [#allocation5], %s518
        %s520 = sand.u32 %s147, 1
        %s521 = smul.addr %s520, 16
        %s522 = scalar_lea.vmem [#allocation8], %s521
        // Predicated region
        $region49: #{tpu_custom_call.1} parent=35 // pred_check
          %p523 = pneg %p157
        $region50: #{tpu_custom_call.1} parent=35 // pred_check_branch
          %525 = sbr.rel (%p523) target = $region52
        $region51: #{tpu_custom_call.1} parent=35 // pred_region
          %s527 = ssub.s32 256, 256
          %528 = vsyncadd %s519, %s527
          %s529 = smul.addr %s28, 2
          %s530 = sadd.s32 %s29, %s529
          %s531 = smul.addr %s530, 128
          %s532 = scalar_lea.hbm %s4, %s531
          %s533 = sshll.u32 %s522, 4
          %s534 = int_to_ptr.vmem [resolvable:$true] %s533
          %539 = dma.vmem_to_hbm [thread:$0]  %s534, 256, %s532, %s519, 128, 128, 8
        $region52: #{tpu_custom_call.1} parent=35 // pred_fallthru
          _
      $region36: #{tpu_custom_call.1} parent=5 // pred_fallthru
        _
      %p540 = scmp.le.s32.totalorder 2, %s19
      // Predicated region
      $region53: #{tpu_custom_call.1} parent=5 // pred_check
        %p541 = pneg %p540
      $region54: #{tpu_custom_call.1} parent=5 // pred_check_branch
        %543 = sbr.rel (%p541) target = $region56
      $region55: #{tpu_custom_call.1} parent=5 // pred_region
        %s544 = ssub.s32 %s19, 2
        // Predicated region
        $region57: #{tpu_custom_call.1} parent=55 // pred_check
          %p545 = pneg %p163
        $region58: #{tpu_custom_call.1} parent=55 // pred_check_branch
          %547 = sbr.rel (%p545) target = $region60
        $region59: #{tpu_custom_call.1} parent=55 // pred_region
          %s548 = sand.u32 %s148, 1
          %s549 = scalar_lea.sflag [#allocation5], %s548
          %s550 = sand.u32 %s148, 1
          %s551 = smul.addr %s550, 16
          %s552 = scalar_lea.vmem [#allocation8], %s551
          %553 = dma.done %s549, 256
        $region60: #{tpu_custom_call.1} parent=55 // pred_fallthru
          _
      $region56: #{tpu_custom_call.1} parent=5 // pred_fallthru
        _
    $region6: #{tpu_custom_call.1} parent=1 // loop_footer
      %s23 = sadd.s32 1, %s19
    $region7: #{tpu_custom_call.1} parent=1 // loop_footer_branch
      %18 = sbr.rel target = $region3
    $region8: #{tpu_custom_call.1} parent=1 // loop_exit
      _
    %554 = vsyncpa [#allocation4], 1
    %s555 = scalar_lea.sflag [#allocation4], 1
    %556 = vsyncpa %s555, 1
    %557 = vsyncpa [#allocation7], 1
    %s558 = scalar_lea.sflag [#allocation7], 1
    %559 = vsyncpa %s558, 1
    %560 = vsyncpa [#allocation5], 1
    %s561 = scalar_lea.sflag [#allocation5], 1
    %562 = vsyncpa %s561, 1

</llo_original>
